<compile_context>
chip_gen: v7x
topology: tpu7x:2x2x1
jax: 0.10.0
libtpu: 0.0.40
codegen_flags: <defaults>
</compile_context>

<pallas_src>
import functools
import numpy as np
import jax
import jax.numpy as jnp
from jax.experimental import pallas as pl
from jax.experimental.pallas import tpu as pltpu

# ---------------- model dimensions (small, synthetic) ----------------
BZ, SQ = 2, 16          # batch, sequence length
DIM = 32                # language-model hidden dim
VOCAB = 128             # vocab size
N_IMG = 2               # number of images in the batch
C, IMG, PATCH = 3, 16, 8
N_PATCH = (IMG // PATCH) ** 2          # tokens per image (projector.num_queries)
VIT_DIM = 16                           # vision-encoder embed dim
PATCH_FEAT = C * PATCH * PATCH         # 192

LM_LOSS_SCALE = 1.0
REC_LOSS_SCALE = 1.0

# ---------------- packed weight-slab layout (rows are 8-aligned) ----------------
_WP_VIT = 0                            # vit_w     (PATCH_FEAT, VIT_DIM)
_WP_PROJ = _WP_VIT + PATCH_FEAT        # proj_w    (VIT_DIM, DIM)
_WP_LM1 = _WP_PROJ + VIT_DIM           # lm_w1     (DIM, DIM)
_WP_HEAD = _WP_LM1 + DIM               # [lm_wh | out_proj_w]  (DIM, VOCAB+VIT_DIM)
_WP_BIAS = _WP_HEAD + DIM              # 5 bias rows: vit_b, proj_b, lm_b1, lm_bh, out_b
_WP_ROWS = ((_WP_BIAS + 8 + 7) // 8) * 8
_WP_COLS = VOCAB + VIT_DIM             # 144


def _round_up(x, m):
    return ((x + m - 1) // m) * m


# ---------------- fused Pallas kernel ----------------

def _seed_fused_kernel(x_ref, emb_ref, wpack_ref, spack_ref, lbl_ref, loss_ref,
                       *, np_all, n_gen, m, c_gsel, c_gath):
    f32 = jnp.float32

    # --- packed weight slab: static, 8-aligned row windows at lane offset 0 ---
    vit_w = wpack_ref[_WP_VIT:_WP_VIT + PATCH_FEAT, 0:VIT_DIM]
    proj_w = wpack_ref[_WP_PROJ:_WP_PROJ + VIT_DIM, 0:DIM]
    lm_w1 = wpack_ref[_WP_LM1:_WP_LM1 + DIM, 0:DIM]
    head_w = wpack_ref[_WP_HEAD:_WP_HEAD + DIM, 0:VOCAB + VIT_DIM]   # [lm_wh | out_w]
    bias = wpack_ref[_WP_BIAS:_WP_BIAS + 8, :]
    vit_b = bias[0:1, 0:VIT_DIM]
    proj_b = bias[1:2, 0:DIM]
    lm_b1 = bias[2:3, 0:DIM]
    lm_bh = bias[3:4, 0:VOCAB]
    out_b = bias[4:5, 0:VIT_DIM]

    # --- static mapping slab (built once on the host) ---
    sp = spack_ref[...]
    S = sp[0:m, 0:np_all]                           # scat @ cmp_sel pre-folded on host
    row_is_img = sp[0:m, np_all:np_all + 1] > 0.0   # precomputed on host (static)
    gen_sel = sp[0:n_gen, c_gsel:c_gsel + np_all]
    gather = sp[0:n_gen, c_gath:c_gath + m]

    # --- vision encoder (frozen): patch-embed matmul on the MXU ---
    # (forward-only script: stop_gradient / detach semantics are moot here)
    img_emb = jnp.dot(x_ref[...], vit_w, preferred_element_type=f32) + vit_b   # (np_all, VIT_DIM)

    # --- projector + one-hot-matmul scatter of image tokens into text embeds ---
    # input_embeds[ids_cmp_mask] = projector(image_embeds[embeds_cmp_mask])
    img_proj = jnp.dot(img_emb, proj_w, preferred_element_type=f32)            # (np_all, DIM)
    scattered = jnp.dot(S, img_proj, preferred_element_type=f32) + proj_b      # (m, DIM)
    embeds = jnp.where(row_is_img, scattered, emb_ref[...])                    # (m, DIM)

    # --- synthetic LM: hidden = tanh(x@W1+b1); fused head [lm_wh | out_w] ---
    hidden = jnp.tanh(jnp.dot(embeds, lm_w1, preferred_element_type=f32) + lm_b1)
    hw = jnp.dot(hidden, head_w, preferred_element_type=f32)                   # (m, VOCAB+VIT_DIM)
    logits = hw[:, 0:VOCAB] + lm_bh

    # --- shifted mean cross-entropy; logits never leave VMEM ---
    lbl = lbl_ref[...]                                                          # (m, 1) int32
    valid = (lbl >= 0).astype(f32)                                              # ignore_index = -100
    col = jax.lax.broadcasted_iota(jnp.int32, (m, VOCAB), 1)
    mx = jnp.max(logits, axis=-1, keepdims=True)
    lse = mx + jnp.log(jnp.sum(jnp.exp(logits - mx), axis=-1, keepdims=True))
    picked = jnp.sum(jnp.where(col == lbl, logits, 0.0), axis=-1, keepdims=True)
    count = jnp.sum(valid)
    # NOTE: PyTorch F.cross_entropy returns NaN when every label is ignored; we return 0.0.
    lm_loss = jnp.sum((lse - picked) * valid) / jnp.maximum(count, 1.0)

    # --- reconstruction branch: rec = gather @ (hidden @ out_w) + out_b (re-associated) ---
    tgt = jnp.dot(gen_sel, img_emb, preferred_element_type=f32)                 # (n_gen, VIT_DIM)
    rec = jnp.dot(gather, hw[:, VOCAB:VOCAB + VIT_DIM],
                  preferred_element_type=f32) + out_b                           # (n_gen, VIT_DIM)
    # NOTE: torch cosine_similarity clamps each norm at eps=1e-8; rsqrt(.+1e-12) differs
    # only for near-zero-norm rows.
    eps = 1e-12
    rn = rec * jax.lax.rsqrt(jnp.sum(rec * rec, axis=-1, keepdims=True) + eps)
    tn = tgt * jax.lax.rsqrt(jnp.sum(tgt * tgt, axis=-1, keepdims=True) + eps)
    cos = jnp.sum(rn * tn, axis=-1, keepdims=True)                              # (n_gen, 1)
    rec_loss = jnp.sum(1.0 - cos) * (1.0 / float(n_gen))

    loss_ref[0] = LM_LOSS_SCALE * lm_loss + REC_LOSS_SCALE * rec_loss
    loss_ref[1] = lm_loss
    loss_ref[2] = rec_loss


def _seed_fused_call(x_patch, input_embeds, wpack, spack, shift_labels, *,
                     np_all, n_gen, m, c_gsel, c_gath):
    kernel = functools.partial(_seed_fused_kernel, np_all=np_all, n_gen=n_gen,
                               m=m, c_gsel=c_gsel, c_gath=c_gath)
    vmem = pltpu.MemorySpace.VMEM
    return pl.pallas_call(
        kernel,
        out_shape=jax.ShapeDtypeStruct((3,), jnp.float32),
        in_specs=[pl.BlockSpec(memory_space=vmem)] * 5,
        out_specs=pl.BlockSpec(memory_space=pltpu.MemorySpace.SMEM),
    )(x_patch, input_embeds, wpack, spack, shift_labels)


# ---------------- parameter init (deterministic, synthetic) ----------------

def init_params(key):
    ks = jax.random.split(key, 6)
    s = 0.02
    return dict(
        embed_table=s * jax.random.normal(ks[0], (VOCAB, DIM), jnp.float32),
        vit_w=s * jax.random.normal(ks[1], (PATCH_FEAT, VIT_DIM), jnp.float32),
        vit_b=jnp.zeros((VIT_DIM,), jnp.float32),
        proj_w=s * jax.random.normal(ks[2], (VIT_DIM, DIM), jnp.float32),
        proj_b=jnp.zeros((DIM,), jnp.float32),
        lm_w1=s * jax.random.normal(ks[3], (DIM, DIM), jnp.float32),
        lm_b1=jnp.zeros((DIM,), jnp.float32),
        lm_wh=s * jax.random.normal(ks[4], (DIM, VOCAB), jnp.float32),
        lm_bh=jnp.zeros((VOCAB,), jnp.float32),
        out_proj_w=s * jax.random.normal(ks[5], (DIM, VIT_DIM), jnp.float32),
        out_proj_b=jnp.zeros((VIT_DIM,), jnp.float32),
    )


def prepare_params(params):
    """One-time packing of all weights + biases into a single lane-dense VMEM slab
    (hoisted out of the per-step jitted forward)."""
    wp = np.zeros((_WP_ROWS, _WP_COLS), np.float32)
    wp[_WP_VIT:_WP_VIT + PATCH_FEAT, :VIT_DIM] = np.asarray(params['vit_w'])
    wp[_WP_PROJ:_WP_PROJ + VIT_DIM, :DIM] = np.asarray(params['proj_w'])
    wp[_WP_LM1:_WP_LM1 + DIM, :DIM] = np.asarray(params['lm_w1'])
    wp[_WP_HEAD:_WP_HEAD + DIM, :VOCAB] = np.asarray(params['lm_wh'])
    wp[_WP_HEAD:_WP_HEAD + DIM, VOCAB:VOCAB + VIT_DIM] = np.asarray(params['out_proj_w'])
    wp[_WP_BIAS + 0, :VIT_DIM] = np.asarray(params['vit_b'])
    wp[_WP_BIAS + 1, :DIM] = np.asarray(params['proj_b'])
    wp[_WP_BIAS + 2, :DIM] = np.asarray(params['lm_b1'])
    wp[_WP_BIAS + 3, :VOCAB] = np.asarray(params['lm_bh'])
    wp[_WP_BIAS + 4, :VIT_DIM] = np.asarray(params['out_proj_b'])
    return dict(embed_table=params['embed_table'], wpack=jnp.asarray(wp))


# ---------------- device-side forward (minimal glue + fused kernel) ----------------

@functools.partial(jax.jit, static_argnames=('np_all', 'n_gen', 'c_gsel', 'c_gath'))
def _seed_forward_device(prepared, input_ids, images, labels, spack,
                         np_all, n_gen, c_gsel, c_gath):
    bz, sq = input_ids.shape
    m = bz * sq

    # language_model.get_input_embeddings()(input_ids)  (glue: table gather)
    input_embeds = jnp.take(prepared['embed_table'], input_ids, axis=0).reshape(m, DIM)

    # patchify NCHW images to (n_img*N_PATCH, C*ph*pw) rows (Conv2d patch-embed layout)
    n_img = images.shape[0]
    p = PATCH
    x = images.reshape(n_img, C, IMG // p, p, IMG // p, p)
    x_patch = x.transpose(0, 2, 4, 1, 3, 5).reshape(n_img * N_PATCH, PATCH_FEAT)

    # shifted causal-LM labels; ignore_index = -100 (tiny int32 column instead of one-hot)
    shift_labels = jnp.concatenate(
        [labels[:, 1:], jnp.full((bz, 1), -100, labels.dtype)], axis=1
    ).reshape(m, 1).astype(jnp.int32)

    losses = _seed_fused_call(x_patch, input_embeds, prepared['wpack'], spack,
                              shift_labels, np_all=np_all, n_gen=n_gen, m=m,
                              c_gsel=c_gsel, c_gath=c_gath)
    return {'total_loss': losses[0], 'lm_loss': losses[1], 'rec_loss': losses[2]}


# ---------------- SEED.forward ----------------

def seed_forward(prepared, input_ids, images, attention_mask, labels,
                 embeds_gen_mask, embeds_cmp_mask, ids_gen_mask, ids_cmp_mask):
    # TODO(synk): attention_mask is not consumed by this synthetic stand-in LM.
    bz, sq = input_ids.shape
    m = bz * sq
    n_img = images.shape[0]
    np_all = n_img * N_PATCH

    embeds_cmp_mask = np.asarray(embeds_cmp_mask)
    embeds_gen_mask = np.asarray(embeds_gen_mask)
    ids_cmp_mask = np.asarray(ids_cmp_mask)
    ids_gen_mask = np.asarray(ids_gen_mask)

    # ---- static host-side selection / scatter / gather one-hot matrices ----
    cmp_imgs = np.nonzero(embeds_cmp_mask)[0]
    gen_imgs = np.nonzero(embeds_gen_mask)[0]
    n_cmp_tok = int(cmp_imgs.size) * N_PATCH
    n_gen_tok = int(gen_imgs.size) * N_PATCH

    # TODO(synk): the has_image_input / has_image_output == False fallbacks
    # (fake images / zero rec_loss branches) are not implemented; masks must
    # select at least one cmp image and one gen image.
    assert n_cmp_tok > 0 and n_gen_tok > 0 and n_gen_tok <= m

    cmp_sel = np.zeros((n_cmp_tok, np_all), np.float32)
    for j in range(n_cmp_tok):
        cmp_sel[j, int(cmp_imgs[j // N_PATCH]) * N_PATCH + (j % N_PATCH)] = 1.0
    gen_sel = np.zeros((n_gen_tok, np_all), np.float32)
    for j in range(n_gen_tok):
        gen_sel[j, int(gen_imgs[j // N_PATCH]) * N_PATCH + (j % N_PATCH)] = 1.0

    cmp_pos = np.nonzero(ids_cmp_mask.reshape(-1))[0]   # row-major, matches torch masking
    assert cmp_pos.size == n_cmp_tok
    scat = np.zeros((m, n_cmp_tok), np.float32)
    scat[cmp_pos, np.arange(n_cmp_tok)] = 1.0

    gen_pos = np.nonzero(ids_gen_mask.reshape(-1))[0]
    assert gen_pos.size == n_gen_tok
    gather = np.zeros((n_gen_tok, m), np.float32)
    gather[np.arange(n_gen_tok), gen_pos] = 1.0

    # ---- pre-fold scat @ cmp_sel and pack all static matrices into one slab ----
    S = scat @ cmp_sel                                   # (m, np_all)
    row_is_img = (S.sum(-1) > 0).astype(np.float32)      # static, computed on host
    c_gsel = _round_up(np_all + 1, 8)
    c_gath = _round_up(c_gsel + np_all, 8)
    sp_cols = max(128, _round_up(c_gath + m, 128))
    sp_rows = _round_up(m, 8)
    spack = np.zeros((sp_rows, sp_cols), np.float32)
    spack[:m, 0:np_all] = S
    spack[:m, np_all] = row_is_img
    spack[:n_gen_tok, c_gsel:c_gsel + np_all] = gen_sel
    spack[:n_gen_tok, c_gath:c_gath + m] = gather

    return _seed_forward_device(prepared, input_ids, images,
                                labels.astype(jnp.int32), jnp.asarray(spack),
                                np_all=np_all, n_gen=n_gen_tok,
                                c_gsel=c_gsel, c_gath=c_gath)


# ---------------- driver ----------------

if __name__ == "__main__":
    key = jax.random.PRNGKey(0)
    k_par, k_ids, k_img, k_lbl = jax.random.split(key, 4)

    params = init_params(k_par)
    prepared = prepare_params(params)      # one-time weight packing (hoisted out of per-step jit)

    input_ids = jax.random.randint(k_ids, (BZ, SQ), 0, VOCAB, dtype=jnp.int32)
    images = jax.random.normal(k_img, (N_IMG, C, IMG, IMG), jnp.float32)
    attention_mask = jnp.ones((BZ, SQ), jnp.int32)
    labels = jax.random.randint(k_lbl, (BZ, SQ), 0, VOCAB, dtype=jnp.int32)
    labels = labels.at[:, :2].set(-100)        # exercise ignore_index

    # masks are static host-side booleans (data-dependent shapes need static masks in JAX)
    embeds_cmp_mask = np.array([True, True])                     # both images used as input
    embeds_gen_mask = np.array([True, False])                    # first image is a gen target
    ids_cmp_mask = np.zeros((BZ, SQ), dtype=bool)
    ids_cmp_mask[0, 2:2 + N_PATCH] = True                        # image 0 tokens
    ids_cmp_mask[1, 2:2 + N_PATCH] = True                        # image 1 tokens
    ids_gen_mask = np.zeros((BZ, SQ), dtype=bool)
    ids_gen_mask[0, 10:10 + N_PATCH] = True                      # gen tokens for image 0

    out = seed_forward(prepared, input_ids, images, attention_mask, labels,
                       embeds_gen_mask, embeds_cmp_mask, ids_gen_mask, ids_cmp_mask)
    jax.block_until_ready(out)
    assert np.isfinite(float(out['total_loss']))
    assert np.isfinite(float(out['lm_loss']))
    assert np.isfinite(float(out['rec_loss']))
    print("KERNEL_OK")
</pallas_src>

<mosaic_0001>
module attributes {stable_mosaic.version = 11 : i64} {
  func.func @_seed_fused_kernel(%arg0: memref<8x192xf32, #tpu.memory_space<vmem>>, %arg1: memref<32x32xf32, #tpu.memory_space<vmem>>, %arg2: memref<280x144xf32, #tpu.memory_space<vmem>>, %arg3: memref<32x128xf32, #tpu.memory_space<vmem>>, %arg4: memref<32x1xi32, #tpu.memory_space<vmem>>, %arg5: memref<3xf32, #tpu.memory_space<smem>>) attributes {dimension_semantics = [], scalar_prefetch = 0 : i64, scratch_operands = 0 : i64, tpu.core_type = #tpu.core_type<tc>} {
    %c0 = arith.constant 0 : index
    %c0_0 = arith.constant 0 : index
    %0 = vector.load %arg2[%c0, %c0_0] : memref<280x144xf32, #tpu.memory_space<vmem>>, vector<192x16xf32>
    %c192 = arith.constant 192 : index
    %c0_1 = arith.constant 0 : index
    %1 = vector.load %arg2[%c192, %c0_1] : memref<280x144xf32, #tpu.memory_space<vmem>>, vector<16x32xf32>
    %c208 = arith.constant 208 : index
    %c0_2 = arith.constant 0 : index
    %2 = vector.load %arg2[%c208, %c0_2] : memref<280x144xf32, #tpu.memory_space<vmem>>, vector<32x32xf32>
    %c240 = arith.constant 240 : index
    %c0_3 = arith.constant 0 : index
    %3 = vector.load %arg2[%c240, %c0_3] : memref<280x144xf32, #tpu.memory_space<vmem>>, vector<32x144xf32>
    %c272 = arith.constant 272 : index
    %c0_4 = arith.constant 0 : index
    %4 = vector.load %arg2[%c272, %c0_4] : memref<280x144xf32, #tpu.memory_space<vmem>>, vector<8x144xf32>
    %5 = vector.extract_strided_slice %4 {offsets = [0, 0], sizes = [1, 16], strides = [1, 1]} : vector<8x144xf32> to vector<1x16xf32>
    %6 = vector.extract_strided_slice %4 {offsets = [1, 0], sizes = [1, 32], strides = [1, 1]} : vector<8x144xf32> to vector<1x32xf32>
    %7 = vector.extract_strided_slice %4 {offsets = [2, 0], sizes = [1, 32], strides = [1, 1]} : vector<8x144xf32> to vector<1x32xf32>
    %8 = vector.extract_strided_slice %4 {offsets = [3, 0], sizes = [1, 128], strides = [1, 1]} : vector<8x144xf32> to vector<1x128xf32>
    %9 = vector.extract_strided_slice %4 {offsets = [4, 0], sizes = [1, 16], strides = [1, 1]} : vector<8x144xf32> to vector<1x16xf32>
    %c0_5 = arith.constant 0 : index
    %c0_6 = arith.constant 0 : index
    %10 = vector.load %arg3[%c0_5, %c0_6] : memref<32x128xf32, #tpu.memory_space<vmem>>, vector<32x128xf32>
    %11 = vector.extract_strided_slice %10 {offsets = [0, 0], sizes = [32, 8], strides = [1, 1]} : vector<32x128xf32> to vector<32x8xf32>
    %12 = vector.extract_strided_slice %10 {offsets = [0, 8], sizes = [32, 1], strides = [1, 1]} : vector<32x128xf32> to vector<32x1xf32>
    %cst = arith.constant 0.000000e+00 : f32
    %13 = vector.broadcast %cst : f32 to vector<32x1xf32>
    %14 = arith.cmpf ogt, %12, %13 : vector<32x1xf32>
    %15 = vector.extract_strided_slice %10 {offsets = [0, 16], sizes = [4, 8], strides = [1, 1]} : vector<32x128xf32> to vector<4x8xf32>
    %16 = vector.extract_strided_slice %10 {offsets = [0, 24], sizes = [4, 32], strides = [1, 1]} : vector<32x128xf32> to vector<4x32xf32>
    %c0_7 = arith.constant 0 : index
    %c0_8 = arith.constant 0 : index
    %17 = vector.load %arg0[%c0_7, %c0_8] : memref<8x192xf32, #tpu.memory_space<vmem>>, vector<8x192xf32>
    %cst_9 = arith.constant dense<0.000000e+00> : vector<8x16xf32>
    %18 = tpu.matmul %17, %0, %cst_9 {dimension_numbers = #tpu.dot_dimension_numbers<[1], [0], [0], [1], [0, 0, 1, 1], [], []>} : vector<8x192xf32>, vector<192x16xf32>, vector<8x16xf32> -> vector<8x16xf32>
    %19 = vector.broadcast %5 : vector<1x16xf32> to vector<8x16xf32>
    %20 = arith.addf %18, %19 : vector<8x16xf32>
    %cst_10 = arith.constant dense<0.000000e+00> : vector<8x32xf32>
    %21 = tpu.matmul %20, %1, %cst_10 {dimension_numbers = #tpu.dot_dimension_numbers<[1], [0], [0], [1], [0, 0, 1, 1], [], []>} : vector<8x16xf32>, vector<16x32xf32>, vector<8x32xf32> -> vector<8x32xf32>
    %cst_11 = arith.constant dense<0.000000e+00> : vector<32x32xf32>
    %22 = tpu.matmul %11, %21, %cst_11 {dimension_numbers = #tpu.dot_dimension_numbers<[1], [0], [0], [1], [0, 0, 1, 1], [], []>} : vector<32x8xf32>, vector<8x32xf32>, vector<32x32xf32> -> vector<32x32xf32>
    %23 = vector.broadcast %6 : vector<1x32xf32> to vector<32x32xf32>
    %24 = arith.addf %22, %23 : vector<32x32xf32>
    %c0_12 = arith.constant 0 : index
    %c0_13 = arith.constant 0 : index
    %25 = vector.load %arg1[%c0_12, %c0_13] : memref<32x32xf32, #tpu.memory_space<vmem>>, vector<32x32xf32>
    %26 = vector.shape_cast %14 : vector<32x1xi1> to vector<32x1xi1>
    %27 = vector.broadcast %26 : vector<32x1xi1> to vector<32x32xi1>
    %28 = arith.select %27, %24, %25 : vector<32x32xi1>, vector<32x32xf32>
    %cst_14 = arith.constant dense<0.000000e+00> : vector<32x32xf32>
    %29 = tpu.matmul %28, %2, %cst_14 {dimension_numbers = #tpu.dot_dimension_numbers<[1], [0], [0], [1], [0, 0, 1, 1], [], []>} : vector<32x32xf32>, vector<32x32xf32>, vector<32x32xf32> -> vector<32x32xf32>
    %30 = vector.broadcast %7 : vector<1x32xf32> to vector<32x32xf32>
    %31 = arith.addf %29, %30 : vector<32x32xf32>
    %32 = math.tanh %31 : vector<32x32xf32>
    %cst_15 = arith.constant dense<0.000000e+00> : vector<32x144xf32>
    %33 = tpu.matmul %32, %3, %cst_15 {dimension_numbers = #tpu.dot_dimension_numbers<[1], [0], [0], [1], [0, 0, 1, 1], [], []>} : vector<32x32xf32>, vector<32x144xf32>, vector<32x144xf32> -> vector<32x144xf32>
    %34 = vector.extract_strided_slice %33 {offsets = [0, 0], sizes = [32, 128], strides = [1, 1]} : vector<32x144xf32> to vector<32x128xf32>
    %35 = vector.broadcast %8 : vector<1x128xf32> to vector<32x128xf32>
    %36 = arith.addf %34, %35 : vector<32x128xf32>
    %c0_16 = arith.constant 0 : index
    %c0_17 = arith.constant 0 : index
    %37 = vector.load %arg4[%c0_16, %c0_17] : memref<32x1xi32, #tpu.memory_space<vmem>>, vector<32x1xi32>
    %c0_i32 = arith.constant 0 : i32
    %38 = vector.broadcast %c0_i32 : i32 to vector<32x1xi32>
    %39 = arith.cmpi sge, %37, %38 : vector<32x1xi32>
    %40 = arith.extui %39 : vector<32x1xi1> to vector<32x1xi32>
    %41 = arith.sitofp %40 : vector<32x1xi32> to vector<32x1xf32>
    %42 = tpu.iota {dimensions = array<i32: 1>} : vector<32x128xi32>
    %cst_18 = arith.constant dense<0xFF800000> : vector<32xf32>
    %43 = vector.multi_reduction <maximumf>, %36, %cst_18 [1] : vector<32x128xf32> to vector<32xf32>
    %44 = vector.shape_cast %43 : vector<32xf32> to vector<32x1xf32>
    %45 = vector.broadcast %44 : vector<32x1xf32> to vector<32x128xf32>
    %46 = arith.subf %36, %45 : vector<32x128xf32>
    %47 = math.exp %46 : vector<32x128xf32>
    %cst_19 = arith.constant dense<0.000000e+00> : vector<32xf32>
    %48 = vector.multi_reduction <add>, %47, %cst_19 [1] : vector<32x128xf32> to vector<32xf32>
    %49 = vector.shape_cast %48 : vector<32xf32> to vector<32x1xf32>
    %50 = math.log %49 : vector<32x1xf32>
    %51 = arith.addf %44, %50 : vector<32x1xf32>
    %52 = vector.broadcast %37 : vector<32x1xi32> to vector<32x128xi32>
    %53 = arith.cmpi eq, %42, %52 : vector<32x128xi32>
    %cst_20 = arith.constant 0.000000e+00 : f32
    %54 = vector.broadcast %cst_20 : f32 to vector<32x128xf32>
    %55 = arith.select %53, %36, %54 : vector<32x128xi1>, vector<32x128xf32>
    %cst_21 = arith.constant dense<0.000000e+00> : vector<32xf32>
    %56 = vector.multi_reduction <add>, %55, %cst_21 [1] : vector<32x128xf32> to vector<32xf32>
    %57 = vector.shape_cast %56 : vector<32xf32> to vector<32x1xf32>
    %58 = vector.shape_cast %41 : vector<32x1xf32> to vector<1x32x1xf32>
    %cst_22 = arith.constant dense<0.000000e+00> : vector<1xf32>
    %59 = vector.multi_reduction <add>, %58, %cst_22 [1, 2] : vector<1x32x1xf32> to vector<1xf32>
    %60 = vector.shape_cast %59 : vector<1xf32> to vector<1x1x1xf32>
    %61 = vector.extract %60[0, 0, 0] : f32 from vector<1x1x1xf32>
    %62 = arith.subf %51, %57 : vector<32x1xf32>
    %63 = arith.mulf %62, %41 : vector<32x1xf32>
    %64 = vector.shape_cast %63 : vector<32x1xf32> to vector<1x32x1xf32>
    %cst_23 = arith.constant dense<0.000000e+00> : vector<1xf32>
    %65 = vector.multi_reduction <add>, %64, %cst_23 [1, 2] : vector<1x32x1xf32> to vector<1xf32>
    %66 = vector.shape_cast %65 : vector<1xf32> to vector<1x1x1xf32>
    %67 = vector.extract %66[0, 0, 0] : f32 from vector<1x1x1xf32>
    %cst_24 = arith.constant 1.000000e+00 : f32
    %68 = arith.maximumf %61, %cst_24 : f32
    %69 = arith.divf %67, %68 : f32
    %cst_25 = arith.constant dense<0.000000e+00> : vector<4x16xf32>
    %70 = tpu.matmul %15, %20, %cst_25 {dimension_numbers = #tpu.dot_dimension_numbers<[1], [0], [0], [1], [0, 0, 1, 1], [], []>} : vector<4x8xf32>, vector<8x16xf32>, vector<4x16xf32> -> vector<4x16xf32>
    %71 = vector.extract_strided_slice %33 {offsets = [0, 128], sizes = [32, 16], strides = [1, 1]} : vector<32x144xf32> to vector<32x16xf32>
    %cst_26 = arith.constant dense<0.000000e+00> : vector<4x16xf32>
    %72 = tpu.matmul %16, %71, %cst_26 {dimension_numbers = #tpu.dot_dimension_numbers<[1], [0], [0], [1], [0, 0, 1, 1], [], []>} : vector<4x32xf32>, vector<32x16xf32>, vector<4x16xf32> -> vector<4x16xf32>
    %73 = vector.broadcast %9 : vector<1x16xf32> to vector<4x16xf32>
    %74 = arith.addf %72, %73 : vector<4x16xf32>
    %75 = arith.mulf %74, %74 : vector<4x16xf32>
    %cst_27 = arith.constant dense<0.000000e+00> : vector<4xf32>
    %76 = vector.multi_reduction <add>, %75, %cst_27 [1] : vector<4x16xf32> to vector<4xf32>
    %77 = vector.shape_cast %76 : vector<4xf32> to vector<4x1xf32>
    %cst_28 = arith.constant 9.99999996E-13 : f32
    %78 = vector.broadcast %cst_28 : f32 to vector<4x1xf32>
    %79 = arith.addf %77, %78 : vector<4x1xf32>
    %80 = math.rsqrt %79 : vector<4x1xf32>
    %81 = vector.broadcast %80 : vector<4x1xf32> to vector<4x16xf32>
    %82 = arith.mulf %74, %81 : vector<4x16xf32>
    %83 = arith.mulf %70, %70 : vector<4x16xf32>
    %cst_29 = arith.constant dense<0.000000e+00> : vector<4xf32>
    %84 = vector.multi_reduction <add>, %83, %cst_29 [1] : vector<4x16xf32> to vector<4xf32>
    %85 = vector.shape_cast %84 : vector<4xf32> to vector<4x1xf32>
    %cst_30 = arith.constant 9.99999996E-13 : f32
    %86 = vector.broadcast %cst_30 : f32 to vector<4x1xf32>
    %87 = arith.addf %85, %86 : vector<4x1xf32>
    %88 = math.rsqrt %87 : vector<4x1xf32>
    %89 = vector.broadcast %88 : vector<4x1xf32> to vector<4x16xf32>
    %90 = arith.mulf %70, %89 : vector<4x16xf32>
    %91 = arith.mulf %82, %90 : vector<4x16xf32>
    %cst_31 = arith.constant dense<0.000000e+00> : vector<4xf32>
    %92 = vector.multi_reduction <add>, %91, %cst_31 [1] : vector<4x16xf32> to vector<4xf32>
    %93 = vector.shape_cast %92 : vector<4xf32> to vector<4x1xf32>
    %cst_32 = arith.constant 1.000000e+00 : f32
    %94 = vector.broadcast %cst_32 : f32 to vector<4x1xf32>
    %95 = arith.subf %94, %93 : vector<4x1xf32>
    %96 = vector.shape_cast %95 : vector<4x1xf32> to vector<1x4x1xf32>
    %cst_33 = arith.constant dense<0.000000e+00> : vector<1xf32>
    %97 = vector.multi_reduction <add>, %96, %cst_33 [1, 2] : vector<1x4x1xf32> to vector<1xf32>
    %98 = vector.shape_cast %97 : vector<1xf32> to vector<1x1x1xf32>
    %99 = vector.extract %98[0, 0, 0] : f32 from vector<1x1x1xf32>
    %cst_34 = arith.constant 2.500000e-01 : f32
    %100 = arith.mulf %99, %cst_34 : f32
    %cst_35 = arith.constant 1.000000e+00 : f32
    %101 = arith.mulf %cst_35, %69 : f32
    %cst_36 = arith.constant 1.000000e+00 : f32
    %102 = arith.mulf %cst_36, %100 : f32
    %103 = arith.addf %101, %102 : f32
    %c0_37 = arith.constant 0 : index
    %104 = memref.load %arg5[%c0_37] : memref<3xf32, #tpu.memory_space<smem>>
    memref.store %103, %arg5[%c0_37] : memref<3xf32, #tpu.memory_space<smem>>
    %c1 = arith.constant 1 : index
    %105 = memref.load %arg5[%c1] : memref<3xf32, #tpu.memory_space<smem>>
    memref.store %69, %arg5[%c1] : memref<3xf32, #tpu.memory_space<smem>>
    %c2 = arith.constant 2 : index
    %106 = memref.load %arg5[%c2] : memref<3xf32, #tpu.memory_space<smem>>
    memref.store %100, %arg5[%c2] : memref<3xf32, #tpu.memory_space<smem>>
    return
  }
}

</mosaic_0001>

<llo_original>
// kernel: _seed_forward_device.1
$region0: #{_seed_forward_device.1}
  #allocation0 [shape = 'u32[]', space=smem, size = 0x4, offset = 0x4, fixed_abs, tag = 'smem constant byte address 0x4 - core index']
  #allocation1 [shape = 'u32[144,128]{1,0:T(1,128)}', space=vmem, size = 0x12000, scoped, tag = 'internal scratch']
  %s0 = inlined_call_operand.vmem [shape: f32[8,192], index: 0, kind: input, shape index: {}]
  %s1 = inlined_call_operand.vmem [shape: f32[32,32], index: 1, kind: input, shape index: {}]
  %s2 = inlined_call_operand.vmem [shape: f32[280,144], index: 2, kind: input, shape index: {}]
  %s3 = inlined_call_operand.vmem [shape: f32[32,128], index: 3, kind: input, shape index: {}]
  %s4 = inlined_call_operand.vmem [shape: s32[32,1], index: 4, kind: input, shape index: {}]
  %s5 = inlined_call_operand.vmem [shape: f32[3], index: 5, kind: output, shape index: {}]
  %s6 = sld [smem:[#allocation0]]
  $region30: #{_seed_forward_device.1} parent=0
    _
  %s8 = ssub.s32 1, %s6
  %s9 = scalar_select 0, %s8, %s6
  $region1: #{_seed_forward_device.1} parent=0
    #allocation2 [shape = 'u8[512]{0}', space=smem, size = 0x200, scoped, tag = 'output window, operand 0, single buffered']
    #allocation3 [shape = 's32[1]{0}', space=sflag, size = 0x4, scoped, tag = 'scoped memory for _seed_forward_device.1']
    %10 = vsyncpa [#allocation3], 0
    // Predicated region
    $region2: #{_seed_forward_device.1} parent=1 // pred_check
      _
    $region3: #{_seed_forward_device.1} parent=1 // pred_check_branch
      %12 = sbr.rel (0) target = $region5
    $region4: #{_seed_forward_device.1} parent=1 // pred_region
      _
    $region5: #{_seed_forward_device.1} parent=1 // pred_fallthru
      _
    // Predicated region
    $region6: #{_seed_forward_device.1} parent=1 // pred_check
      _
    $region7: #{_seed_forward_device.1} parent=1 // pred_check_branch
      %14 = sbr.rel (0) target = $region9
    $region8: #{_seed_forward_device.1} parent=1 // pred_region
      _
    $region9: #{_seed_forward_device.1} parent=1 // pred_fallthru
      _
    // Predicated region
    $region10: #{_seed_forward_device.1} parent=1 // pred_check
      _
    $region11: #{_seed_forward_device.1} parent=1 // pred_check_branch
      %16 = sbr.rel (0) target = $region13
    $region12: #{_seed_forward_device.1} parent=1 // pred_region
      _
    $region13: #{_seed_forward_device.1} parent=1 // pred_fallthru
      _
    // Predicated region
    $region14: #{_seed_forward_device.1} parent=1 // pred_check
      _
    $region15: #{_seed_forward_device.1} parent=1 // pred_check_branch
      %18 = sbr.rel (0) target = $region17
    $region16: #{_seed_forward_device.1} parent=1 // pred_region
      _
    $region17: #{_seed_forward_device.1} parent=1 // pred_fallthru
      _
    // Predicated region
    $region18: #{_seed_forward_device.1} parent=1 // pred_check
      _
    $region19: #{_seed_forward_device.1} parent=1 // pred_check_branch
      %20 = sbr.rel (0) target = $region21
    $region20: #{_seed_forward_device.1} parent=1 // pred_region
      _
    $region21: #{_seed_forward_device.1} parent=1 // pred_fallthru
      _
    %v21 = vld [vmem:[%s2] sm:$0xff]
    %v22 = vld [vmem:[%s2 + $0x10] sm:$0xff]
    %v23 = vld [vmem:[%s2 + $0x20] sm:$0xff]
    %v24 = vld [vmem:[%s2 + $0x30] sm:$0xff]
    %v25 = vld [vmem:[%s2 + $0x40] sm:$0xff]
    %v26 = vld [vmem:[%s2 + $0x50] sm:$0xff]
    %v27 = vld [vmem:[%s2 + $0x60] sm:$0xff]
    %v28 = vld [vmem:[%s2 + $0x70] sm:$0xff]
    %v29 = vld [vmem:[%s2 + $0x80] sm:$0xff]
    %v30 = vld [vmem:[%s2 + $0x90] sm:$0xff]
    %v31 = vld [vmem:[%s2 + $0xa0] sm:$0xff]
    %v32 = vld [vmem:[%s2 + $0xb0] sm:$0xff]
    %v33 = vld [vmem:[%s2 + $0xc0] sm:$0xff]
    %v34 = vld [vmem:[%s2 + $0xd0] sm:$0xff]
    %v35 = vld [vmem:[%s2 + $0xe0] sm:$0xff]
    %v36 = vld [vmem:[%s2 + $0xf0] sm:$0xff]
    %v37 = vld [vmem:[%s2 + $0x100] sm:$0xff]
    %v38 = vld [vmem:[%s2 + $0x110] sm:$0xff]
    %v39 = vld [vmem:[%s2 + $0x120] sm:$0xff]
    %v40 = vld [vmem:[%s2 + $0x130] sm:$0xff]
    %v41 = vld [vmem:[%s2 + $0x140] sm:$0xff]
    %v42 = vld [vmem:[%s2 + $0x150] sm:$0xff]
    %v43 = vld [vmem:[%s2 + $0x160] sm:$0xff]
    %v44 = vld [vmem:[%s2 + $0x170] sm:$0xff]
    %v45 = vld [vmem:[%s2 + $0x180] sm:$0xff]
    %v46 = vld [vmem:[%s2 + $0x190] sm:$0xff]
    %v47 = vld [vmem:[%s2 + $0x1a0] sm:$0xff]
    %v48 = vld [vmem:[%s2 + $0x1b0] sm:$0xff]
    %v49 = vld [vmem:[%s2 + $0x1c0] sm:$0xff]
    %v50 = vld [vmem:[%s2 + $0x1d0] sm:$0xff]
    %v51 = vld [vmem:[%s2 + $0x1e0] sm:$0xff]
    %v52 = vld [vmem:[%s2 + $0x1e8] sm:$0xff]
    %v53 = vld [vmem:[%s2 + $0x1f0] sm:$0xff]
    %v54 = vld [vmem:[%s2 + $0x1f8] sm:$0xff]
    %v55 = vld [vmem:[%s2 + $0x200] sm:$0xff]
    %v56 = vld [vmem:[%s2 + $0x208] sm:$0xff]
    %v57 = vld [vmem:[%s2 + $0x210] sm:$0xff]
    %v58 = vld [vmem:[%s2 + $0x218] sm:$0xff]
    %v59 = vld [vmem:[%s2 + $0x220] sm:$0xff]
    %v60 = vld [vmem:[%s3] sm:$0xff]
    %v61 = vld [vmem:[%s3 + $0x8] sm:$0xff]
    %v62 = vld [vmem:[%s3 + $0x10] sm:$0xff]
    %v63 = vld [vmem:[%s3 + $0x18] sm:$0xff]
    %vm64 = vcmp.gt.f32.partialorder %v60, 0.0
    %vm65 = vcmp.gt.f32.partialorder %v61, 0.0
    %vm66 = vcmp.gt.f32.partialorder %v62, 0.0
    %vm67 = vcmp.gt.f32.partialorder %v63, 0.0
    %v68 = vld [vmem:[%s0] sm:$0xff]
    %v69 = vld [vmem:[%s0 + $0x8] sm:$0xff]
    %v70 = vlaneseq
    %v71 = vshrl.u32 %v70, 7
    %v72 = vsub.s32 0, %v71
    %v73 = vrot.slane %v59, %v72
    %vm74 = vcmask 523264
    %v76 = vsel %vm74, %v69, 0
    %78 = vmatprep.subr.mxu0 0.0
    %79 = vmatpush1.msra.mxu0 %v21
    %80 = vmatprep.subr.mxu0 0.0
    %81 = vmatpush1.msra.mxu0 %v22
    %82 = vmatprep.subr.mxu0 0.0
    %83 = vmatpush1.msra.mxu0 %v23
    %84 = vmatprep.subr.mxu0 0.0
    %85 = vmatpush1.msra.mxu0 %v24
    %86 = vmatprep.subr.mxu0 0.0
    %87 = vmatpush1.msra.mxu0 %v25
    %88 = vmatprep.subr.mxu0 0.0
    %89 = vmatpush1.msra.mxu0 %v26
    %90 = vmatprep.subr.mxu0 0.0
    %91 = vmatpush1.msra.mxu0 %v27
    %92 = vmatprep.subr.mxu0 0.0
    %93 = vmatpush1.msra.mxu0 %v28
    %94 = vmatprep.subr.mxu0 0.0
    %95 = vmatpush1.msra.mxu0 %v29
    %96 = vmatprep.subr.mxu0 0.0
    %97 = vmatpush1.msra.mxu0 %v30
    %98 = vmatprep.subr.mxu0 0.0
    %99 = vmatpush1.msra.mxu0 %v31
    %100 = vmatprep.subr.mxu0 0.0
    %101 = vmatpush1.msra.mxu0 %v32
    %102 = vmatprep.subr.mxu0 0.0
    %103 = vmatpush1.msra.mxu0 %v33
    %104 = vmatprep.subr.mxu0 0.0
    %105 = vmatpush1.msra.mxu0 %v34
    %106 = vmatprep.subr.mxu0 0.0
    %107 = vmatpush1.msra.mxu0 %v35
    %108 = vmatprep.subr.mxu0 0.0
    %109 = vmatpush1.msra.mxu0 %v36
    %110 = vmatprep.subr.mxu0 0.0
    %111 = vmatpush1.msra.mxu0 %v37
    %112 = vmatprep.subr.mxu0 0.0
    %113 = vmatpush1.msra.mxu0 %v38
    %114 = vmatprep.subr.mxu0 0.0
    %115 = vmatpush1.msra.mxu0 %v39
    %116 = vmatprep.subr.mxu0 0.0
    %117 = vmatpush1.msra.mxu0 %v40
    %118 = vmatprep.subr.mxu0 0.0
    %119 = vmatpush1.msra.mxu0 %v41
    %120 = vmatprep.subr.mxu0 0.0
    %121 = vmatpush1.msra.mxu0 %v42
    %122 = vmatprep.subr.mxu0 0.0
    %123 = vmatpush1.msra.mxu0 %v43
    %124 = vmatprep.subr.mxu0 0.0
    %125 = vmatpush1.msra.mxu0 %v44
    %126 = vmatprep.subr.mxu0 0.0
    %127 = vmatpush1.msra.mxu0 0.0
    %128 = vmatprep.subr.mxu0 0.0
    %129 = vmatpush1.msra.mxu0 0.0
    %130 = vmatprep.subr.mxu0 0.0
    %131 = vmatpush1.msra.mxu0 0.0
    %132 = vmatprep.subr.mxu0 0.0
    %133 = vmatpush1.msra.mxu0 0.0
    %134 = vmatprep.subr.mxu0 0.0
    %135 = vmatpush1.msra.mxu0 0.0
    %136 = vmatprep.subr.mxu0 0.0
    %137 = vmatpush1.msra.mxu0 0.0
    %138 = vmatprep.subr.mxu0 0.0
    %139 = vmatpush1.msra.mxu0 0.0
    %140 = vmatprep.subr.mxu0 0.0
    %141 = vmatpush1.msra.mxu0 0.0
    %142 = vmatprep.mubr.f32.mxu0 %v76
    %143 = vmatmul.mubr.f32.gmra.mrb[0].mxu0 %v68
    %v144 = vpop.f32.mrb[0].mxu0
    %v145 = vadd.f32 %v73, %v144
    %v146 = vpop.f32.mrb[0].mxu0
    %147 = vdwg.mxu0
    %vm148 = vcmask 130048
    %v150 = vsel %vm148, %v145, 0
    %152 = vmatprep.subr.mxu0 0.0
    %153 = vmatpush1.msra.mxu0 %v45
    %154 = vmatprep.subr.mxu0 0.0
    %155 = vmatpush1.msra.mxu0 %v46
    %156 = vmatprep.subr.mxu0 0.0
    %157 = vmatpush1.msra.mxu0 0.0
    %158 = vmatprep.subr.mxu0 0.0
    %159 = vmatpush1.msra.mxu0 0.0
    %160 = vmatprep.subr.mxu0 0.0
    %161 = vmatpush1.msra.mxu0 0.0
    %162 = vmatprep.subr.mxu0 0.0
    %163 = vmatpush1.msra.mxu0 0.0
    %164 = vmatprep.subr.mxu0 0.0
    %165 = vmatpush1.msra.mxu0 0.0
    %166 = vmatprep.subr.mxu0 0.0
    %167 = vmatpush1.msra.mxu0 0.0
    %168 = vmatprep.subr.mxu0 0.0
    %169 = vmatpush1.msra.mxu0 0.0
    %170 = vmatprep.subr.mxu0 0.0
    %171 = vmatpush1.msra.mxu0 0.0
    %172 = vmatprep.subr.mxu0 0.0
    %173 = vmatpush1.msra.mxu0 0.0
    %174 = vmatprep.subr.mxu0 0.0
    %175 = vmatpush1.msra.mxu0 0.0
    %176 = vmatprep.subr.mxu0 0.0
    %177 = vmatpush1.msra.mxu0 0.0
    %178 = vmatprep.subr.mxu0 0.0
    %179 = vmatpush1.msra.mxu0 0.0
    %180 = vmatprep.subr.mxu0 0.0
    %181 = vmatpush1.msra.mxu0 0.0
    %182 = vmatprep.subr.mxu0 0.0
    %183 = vmatpush1.msra.mxu0 0.0
    %184 = vmatprep.subr.mxu0 0.0
    %185 = vmatpush1.msra.mxu0 0.0
    %186 = vmatprep.subr.mxu0 0.0
    %187 = vmatpush1.msra.mxu0 0.0
    %188 = vmatprep.subr.mxu0 0.0
    %189 = vmatpush1.msra.mxu0 0.0
    %190 = vmatprep.subr.mxu0 0.0
    %191 = vmatpush1.msra.mxu0 0.0
    %192 = vmatprep.subr.mxu0 0.0
    %193 = vmatpush1.msra.mxu0 0.0
    %194 = vmatprep.subr.mxu0 0.0
    %195 = vmatpush1.msra.mxu0 0.0
    %196 = vmatprep.subr.mxu0 0.0
    %197 = vmatpush1.msra.mxu0 0.0
    %198 = vmatprep.subr.mxu0 0.0
    %199 = vmatpush1.msra.mxu0 0.0
    %200 = vmatprep.subr.mxu0 0.0
    %201 = vmatpush1.msra.mxu0 0.0
    %202 = vmatprep.subr.mxu0 0.0
    %203 = vmatpush1.msra.mxu0 0.0
    %204 = vmatprep.subr.mxu0 0.0
    %205 = vmatpush1.msra.mxu0 0.0
    %206 = vmatprep.subr.mxu0 0.0
    %207 = vmatpush1.msra.mxu0 0.0
    %208 = vmatprep.subr.mxu0 0.0
    %209 = vmatpush1.msra.mxu0 0.0
    %210 = vmatprep.subr.mxu0 0.0
    %211 = vmatpush1.msra.mxu0 0.0
    %212 = vmatprep.subr.mxu0 0.0
    %213 = vmatpush1.msra.mxu0 0.0
    %214 = vmatprep.subr.mxu0 0.0
    %215 = vmatpush1.msra.mxu0 0.0
    %216 = vmatprep.mubr.f32.mxu0 0.0
    %217 = vmatmul.mubr.f32.gmra.mrb[0].mxu0 %v150
    %v218 = vpop.f32.mrb[0].mxu0
    %v219 = vadd.f32 0.0, %v218
    %v220 = vpop.f32.mrb[0].mxu0
    %221 = vdwg.mxu0
    %v222 = vlaneseq
    %v223 = vshrl.u32 %v222, 7
    %v224 = vsub.s32 1, %v223
    %v225 = vrot.slane %v59, %v224
    %vm226 = vcmask 64512
    %v228 = vsel %vm226, %v60, 0
    %v231 = vsel %vm226, %v61, 0
    %v234 = vsel %vm226, %v62, 0
    %v237 = vsel %vm226, %v63, 0
    %239 = vmatprep.subr.mxu0 0.0
    %240 = vmatpush1.msra.mxu0 %v219
    %241 = vmatprep.subr.mxu0 0.0
    %242 = vmatpush1.msra.mxu0 0.0
    %243 = vmatprep.subr.mxu0 0.0
    %244 = vmatpush1.msra.mxu0 0.0
    %245 = vmatprep.subr.mxu0 0.0
    %246 = vmatpush1.msra.mxu0 0.0
    %247 = vmatprep.subr.mxu0 0.0
    %248 = vmatpush1.msra.mxu0 0.0
    %249 = vmatprep.subr.mxu0 0.0
    %250 = vmatpush1.msra.mxu0 0.0
    %251 = vmatprep.subr.mxu0 0.0
    %252 = vmatpush1.msra.mxu0 0.0
    %253 = vmatprep.subr.mxu0 0.0
    %254 = vmatpush1.msra.mxu0 0.0
    %255 = vmatprep.subr.mxu0 0.0
    %256 = vmatpush1.msra.mxu0 0.0
    %257 = vmatprep.subr.mxu0 0.0
    %258 = vmatpush1.msra.mxu0 0.0
    %259 = vmatprep.subr.mxu0 0.0
    %260 = vmatpush1.msra.mxu0 0.0
    %261 = vmatprep.subr.mxu0 0.0
    %262 = vmatpush1.msra.mxu0 0.0
    %263 = vmatprep.subr.mxu0 0.0
    %264 = vmatpush1.msra.mxu0 0.0
    %265 = vmatprep.subr.mxu0 0.0
    %266 = vmatpush1.msra.mxu0 0.0
    %267 = vmatprep.subr.mxu0 0.0
    %268 = vmatpush1.msra.mxu0 0.0
    %269 = vmatprep.subr.mxu0 0.0
    %270 = vmatpush1.msra.mxu0 0.0
    %271 = vmatprep.subr.mxu0 0.0
    %272 = vmatpush1.msra.mxu0 0.0
    %273 = vmatprep.subr.mxu0 0.0
    %274 = vmatpush1.msra.mxu0 0.0
    %275 = vmatprep.subr.mxu0 0.0
    %276 = vmatpush1.msra.mxu0 0.0
    %277 = vmatprep.subr.mxu0 0.0
    %278 = vmatpush1.msra.mxu0 0.0
    %279 = vmatprep.subr.mxu0 0.0
    %280 = vmatpush1.msra.mxu0 0.0
    %281 = vmatprep.subr.mxu0 0.0
    %282 = vmatpush1.msra.mxu0 0.0
    %283 = vmatprep.subr.mxu0 0.0
    %284 = vmatpush1.msra.mxu0 0.0
    %285 = vmatprep.subr.mxu0 0.0
    %286 = vmatpush1.msra.mxu0 0.0
    %287 = vmatprep.subr.mxu0 0.0
    %288 = vmatpush1.msra.mxu0 0.0
    %289 = vmatprep.subr.mxu0 0.0
    %290 = vmatpush1.msra.mxu0 0.0
    %291 = vmatprep.subr.mxu0 0.0
    %292 = vmatpush1.msra.mxu0 0.0
    %293 = vmatprep.subr.mxu0 0.0
    %294 = vmatpush1.msra.mxu0 0.0
    %295 = vmatprep.subr.mxu0 0.0
    %296 = vmatpush1.msra.mxu0 0.0
    %297 = vmatprep.subr.mxu0 0.0
    %298 = vmatpush1.msra.mxu0 0.0
    %299 = vmatprep.subr.mxu0 0.0
    %300 = vmatpush1.msra.mxu0 0.0
    %301 = vmatprep.subr.mxu0 0.0
    %302 = vmatpush1.msra.mxu0 0.0
    %303 = vmatprep.mubr.f32.mxu0 0.0
    %304 = vmatmul.mubr.f32.gmra.mrb[0].mxu0 %v228
    %v305 = vpop.f32.mrb[0].mxu0
    %v306 = vadd.f32 %v225, %v305
    %v307 = vpop.f32.mrb[0].mxu0
    %308 = vmatprep.mubr.f32.mxu0 0.0
    %309 = vmatmul.mubr.f32.gmra.mrb[0].mxu0 %v231
    %v310 = vpop.f32.mrb[0].mxu0
    %v311 = vadd.f32 %v225, %v310
    %v312 = vpop.f32.mrb[0].mxu0
    %313 = vmatprep.mubr.f32.mxu0 0.0
    %314 = vmatmul.mubr.f32.gmra.mrb[0].mxu0 %v234
    %v315 = vpop.f32.mrb[0].mxu0
    %v316 = vadd.f32 %v225, %v315
    %v317 = vpop.f32.mrb[0].mxu0
    %318 = vmatprep.mubr.f32.mxu0 0.0
    %319 = vmatmul.mubr.f32.gmra.mrb[0].mxu0 %v237
    %v320 = vpop.f32.mrb[0].mxu0
    %v321 = vadd.f32 %v225, %v320
    %v322 = vpop.f32.mrb[0].mxu0
    %323 = vdwg.mxu0
    %v324 = vld [vmem:[%s1] sm:$0xff]
    %v325 = vld [vmem:[%s1 + $0x8] sm:$0xff]
    %v326 = vld [vmem:[%s1 + $0x10] sm:$0xff]
    %v327 = vld [vmem:[%s1 + $0x18] sm:$0xff]
    %v328 = vsel %vm64, 1, 0
    %v329 = vsel %vm65, 1, 0
    %v330 = vsel %vm66, 1, 0
    %v331 = vsel %vm67, 1, 0
    %332 = vset.pattern.permute.xlu0 8
    %333 = vperm.xlu0 %332, %v328
    %v334 = vpop.permute.xlu0 %333
    %335 = vset.pattern.permute.xlu0 8
    %336 = vperm.xlu0 %335, %v329
    %v337 = vpop.permute.xlu0 %336
    %338 = vset.pattern.permute.xlu0 8
    %339 = vperm.xlu0 %338, %v330
    %v340 = vpop.permute.xlu0 %339
    %341 = vset.pattern.permute.xlu0 8
    %342 = vperm.xlu0 %341, %v331
    %v343 = vpop.permute.xlu0 %342
    %vm344 = vcmp.eq.s32.totalorder %v334, 1
    %vm345 = vcmp.eq.s32.totalorder %v337, 1
    %vm346 = vcmp.eq.s32.totalorder %v340, 1
    %vm347 = vcmp.eq.s32.totalorder %v343, 1
    %v348 = vsel %vm344, %v306, %v324
    %v349 = vsel %vm345, %v311, %v325
    %v350 = vsel %vm346, %v316, %v326
    %v351 = vsel %vm347, %v321, %v327
    %v352 = vlaneseq
    %v353 = vshrl.u32 %v352, 7
    %v354 = vsub.s32 2, %v353
    %v355 = vrot.slane %v59, %v354
    %vm356 = vcmask 261120
    %v358 = vsel %vm356, %v348, 0
    %v361 = vsel %vm356, %v349, 0
    %v364 = vsel %vm356, %v350, 0
    %v367 = vsel %vm356, %v351, 0
    %369 = vmatprep.subr.mxu0 0.0
    %370 = vmatpush1.msra.mxu0 %v47
    %371 = vmatprep.subr.mxu0 0.0
    %372 = vmatpush1.msra.mxu0 %v48
    %373 = vmatprep.subr.mxu0 0.0
    %374 = vmatpush1.msra.mxu0 %v49
    %375 = vmatprep.subr.mxu0 0.0
    %376 = vmatpush1.msra.mxu0 %v50
    %377 = vmatprep.subr.mxu0 0.0
    %378 = vmatpush1.msra.mxu0 0.0
    %379 = vmatprep.subr.mxu0 0.0
    %380 = vmatpush1.msra.mxu0 0.0
    %381 = vmatprep.subr.mxu0 0.0
    %382 = vmatpush1.msra.mxu0 0.0
    %383 = vmatprep.subr.mxu0 0.0
    %384 = vmatpush1.msra.mxu0 0.0
    %385 = vmatprep.subr.mxu0 0.0
    %386 = vmatpush1.msra.mxu0 0.0
    %387 = vmatprep.subr.mxu0 0.0
    %388 = vmatpush1.msra.mxu0 0.0
    %389 = vmatprep.subr.mxu0 0.0
    %390 = vmatpush1.msra.mxu0 0.0
    %391 = vmatprep.subr.mxu0 0.0
    %392 = vmatpush1.msra.mxu0 0.0
    %393 = vmatprep.subr.mxu0 0.0
    %394 = vmatpush1.msra.mxu0 0.0
    %395 = vmatprep.subr.mxu0 0.0
    %396 = vmatpush1.msra.mxu0 0.0
    %397 = vmatprep.subr.mxu0 0.0
    %398 = vmatpush1.msra.mxu0 0.0
    %399 = vmatprep.subr.mxu0 0.0
    %400 = vmatpush1.msra.mxu0 0.0
    %401 = vmatprep.subr.mxu0 0.0
    %402 = vmatpush1.msra.mxu0 0.0
    %403 = vmatprep.subr.mxu0 0.0
    %404 = vmatpush1.msra.mxu0 0.0
    %405 = vmatprep.subr.mxu0 0.0
    %406 = vmatpush1.msra.mxu0 0.0
    %407 = vmatprep.subr.mxu0 0.0
    %408 = vmatpush1.msra.mxu0 0.0
    %409 = vmatprep.subr.mxu0 0.0
    %410 = vmatpush1.msra.mxu0 0.0
    %411 = vmatprep.subr.mxu0 0.0
    %412 = vmatpush1.msra.mxu0 0.0
    %413 = vmatprep.subr.mxu0 0.0
    %414 = vmatpush1.msra.mxu0 0.0
    %415 = vmatprep.subr.mxu0 0.0
    %416 = vmatpush1.msra.mxu0 0.0
    %417 = vmatprep.subr.mxu0 0.0
    %418 = vmatpush1.msra.mxu0 0.0
    %419 = vmatprep.subr.mxu0 0.0
    %420 = vmatpush1.msra.mxu0 0.0
    %421 = vmatprep.subr.mxu0 0.0
    %422 = vmatpush1.msra.mxu0 0.0
    %423 = vmatprep.subr.mxu0 0.0
    %424 = vmatpush1.msra.mxu0 0.0
    %425 = vmatprep.subr.mxu0 0.0
    %426 = vmatpush1.msra.mxu0 0.0
    %427 = vmatprep.subr.mxu0 0.0
    %428 = vmatpush1.msra.mxu0 0.0
    %429 = vmatprep.subr.mxu0 0.0
    %430 = vmatpush1.msra.mxu0 0.0
    %431 = vmatprep.subr.mxu0 0.0
    %432 = vmatpush1.msra.mxu0 0.0
    %433 = vmatprep.mubr.f32.mxu0 0.0
    %434 = vmatmul.mubr.f32.gmra.mrb[0].mxu0 %v358
    %v435 = vpop.f32.mrb[0].mxu0
    %v436 = vadd.f32 %v355, %v435
    %v437 = vpop.f32.mrb[0].mxu0
    %438 = vmatprep.mubr.f32.mxu0 0.0
    %439 = vmatmul.mubr.f32.gmra.mrb[0].mxu0 %v361
    %v440 = vpop.f32.mrb[0].mxu0
    %v441 = vadd.f32 %v355, %v440
    %v442 = vpop.f32.mrb[0].mxu0
    %443 = vmatprep.mubr.f32.mxu0 0.0
    %444 = vmatmul.mubr.f32.gmra.mrb[0].mxu0 %v364
    %v445 = vpop.f32.mrb[0].mxu0
    %v446 = vadd.f32 %v355, %v445
    %v447 = vpop.f32.mrb[0].mxu0
    %448 = vmatprep.mubr.f32.mxu0 0.0
    %449 = vmatmul.mubr.f32.gmra.mrb[0].mxu0 %v367
    %v450 = vpop.f32.mrb[0].mxu0
    %v451 = vadd.f32 %v355, %v450
    %v452 = vpop.f32.mrb[0].mxu0
    %453 = vdwg.mxu0
    %v454 = vtanh.pop %v436
    %v455 = vtanh.pop %v441
    %v456 = vtanh.pop %v446
    %v457 = vtanh.pop %v451
    %v459 = vsel %vm356, %v454, 0
    %v462 = vsel %vm356, %v455, 0
    %v465 = vsel %vm356, %v456, 0
    %v468 = vsel %vm356, %v457, 0
    %470 = vmatprep.subr.mxu0 %v52
    %471 = vmatpush1.msra.mxu0 %v51
    %472 = vmatprep.subr.mxu0 %v54
    %473 = vmatpush1.msra.mxu0 %v53
    %474 = vmatprep.subr.mxu0 %v56
    %475 = vmatpush1.msra.mxu0 %v55
    %476 = vmatprep.subr.mxu0 %v58
    %477 = vmatpush1.msra.mxu0 %v57
    %478 = vmatprep.subr.mxu0 0.0
    %479 = vmatpush1.msra.mxu0 0.0
    %480 = vmatprep.subr.mxu0 0.0
    %481 = vmatpush1.msra.mxu0 0.0
    %482 = vmatprep.subr.mxu0 0.0
    %483 = vmatpush1.msra.mxu0 0.0
    %484 = vmatprep.subr.mxu0 0.0
    %485 = vmatpush1.msra.mxu0 0.0
    %486 = vmatprep.subr.mxu0 0.0
    %487 = vmatpush1.msra.mxu0 0.0
    %488 = vmatprep.subr.mxu0 0.0
    %489 = vmatpush1.msra.mxu0 0.0
    %490 = vmatprep.subr.mxu0 0.0
    %491 = vmatpush1.msra.mxu0 0.0
    %492 = vmatprep.subr.mxu0 0.0
    %493 = vmatpush1.msra.mxu0 0.0
    %494 = vmatprep.subr.mxu0 0.0
    %495 = vmatpush1.msra.mxu0 0.0
    %496 = vmatprep.subr.mxu0 0.0
    %497 = vmatpush1.msra.mxu0 0.0
    %498 = vmatprep.subr.mxu0 0.0
    %499 = vmatpush1.msra.mxu0 0.0
    %500 = vmatprep.subr.mxu0 0.0
    %501 = vmatpush1.msra.mxu0 0.0
    %502 = vmatprep.subr.mxu0 0.0
    %503 = vmatpush1.msra.mxu0 0.0
    %504 = vmatprep.subr.mxu0 0.0
    %505 = vmatpush1.msra.mxu0 0.0
    %506 = vmatprep.subr.mxu0 0.0
    %507 = vmatpush1.msra.mxu0 0.0
    %508 = vmatprep.subr.mxu0 0.0
    %509 = vmatpush1.msra.mxu0 0.0
    %510 = vmatprep.subr.mxu0 0.0
    %511 = vmatpush1.msra.mxu0 0.0
    %512 = vmatprep.subr.mxu0 0.0
    %513 = vmatpush1.msra.mxu0 0.0
    %514 = vmatprep.subr.mxu0 0.0
    %515 = vmatpush1.msra.mxu0 0.0
    %516 = vmatprep.subr.mxu0 0.0
    %517 = vmatpush1.msra.mxu0 0.0
    %518 = vmatprep.subr.mxu0 0.0
    %519 = vmatpush1.msra.mxu0 0.0
    %520 = vmatprep.subr.mxu0 0.0
    %521 = vmatpush1.msra.mxu0 0.0
    %522 = vmatprep.subr.mxu0 0.0
    %523 = vmatpush1.msra.mxu0 0.0
    %524 = vmatprep.subr.mxu0 0.0
    %525 = vmatpush1.msra.mxu0 0.0
    %526 = vmatprep.subr.mxu0 0.0
    %527 = vmatpush1.msra.mxu0 0.0
    %528 = vmatprep.subr.mxu0 0.0
    %529 = vmatpush1.msra.mxu0 0.0
    %530 = vmatprep.subr.mxu0 0.0
    %531 = vmatpush1.msra.mxu0 0.0
    %532 = vmatprep.subr.mxu0 0.0
    %533 = vmatpush1.msra.mxu0 0.0
    %534 = vmatprep.mubr.f32.mxu0 0.0
    %535 = vmatmul.mubr.f32.gmra.mrb[0].mxu0 %v459
    %v536 = vpop.f32.mrb[0].mxu0
    %v537 = vadd.f32 0.0, %v536
    %v538 = vpop.f32.mrb[0].mxu0
    %v539 = vadd.f32 0.0, %v538
    %540 = vmatprep.mubr.f32.mxu0 0.0
    %541 = vmatmul.mubr.f32.gmra.mrb[0].mxu0 %v462
    %v542 = vpop.f32.mrb[0].mxu0
    %v543 = vadd.f32 0.0, %v542
    %v544 = vpop.f32.mrb[0].mxu0
    %v545 = vadd.f32 0.0, %v544
    %546 = vmatprep.mubr.f32.mxu0 0.0
    %547 = vmatmul.mubr.f32.gmra.mrb[0].mxu0 %v465
    %v548 = vpop.f32.mrb[0].mxu0
    %v549 = vadd.f32 0.0, %v548
    %v550 = vpop.f32.mrb[0].mxu0
    %v551 = vadd.f32 0.0, %v550
    %552 = vmatprep.mubr.f32.mxu0 0.0
    %553 = vmatmul.mubr.f32.gmra.mrb[0].mxu0 %v468
    %v554 = vpop.f32.mrb[0].mxu0
    %v555 = vadd.f32 0.0, %v554
    %v556 = vpop.f32.mrb[0].mxu0
    %v557 = vadd.f32 0.0, %v556
    %558 = vdwg.mxu0
    %v559 = vlaneseq
    %v560 = vshrl.u32 %v559, 7
    %v561 = vsub.s32 3, %v560
    %v562 = vrot.slane %v59, %v561
    %v563 = vadd.f32 %v537, %v562
    %v564 = vadd.f32 %v543, %v562
    %v565 = vadd.f32 %v549, %v562
    %v566 = vadd.f32 %v555, %v562
    %v567 = vld [vmem:[%s4] sm:$0xff]
    %v568 = vld [vmem:[%s4 + $0x8] sm:$0xff]
    %v569 = vld [vmem:[%s4 + $0x10] sm:$0xff]
    %v570 = vld [vmem:[%s4 + $0x18] sm:$0xff]
    %vm571 = vcmp.ge.s32.totalorder %v567, 0
    %vm572 = vcmp.ge.s32.totalorder %v568, 0
    %vm573 = vcmp.ge.s32.totalorder %v569, 0
    %vm574 = vcmp.ge.s32.totalorder %v570, 0
    %v575 = vsel %vm571, 1, 0
    %v576 = vsel %vm572, 1, 0
    %v577 = vsel %vm573, 1, 0
    %v578 = vsel %vm574, 1, 0
    %v579 = vcvt.s32.f32 %v575
    %v580 = vcvt.s32.f32 %v576
    %v581 = vcvt.s32.f32 %v577
    %v582 = vcvt.s32.f32 %v578
    %v583 = vlaneseq
    %v584 = vand.u32 %v583, 127
    %585 = vmax.xlane.f32.xlu0 %v563
    %v586 = vpop.xlane.xlu0 %585
    %587 = vmax.xlane.f32.xlu0 %v564
    %v588 = vpop.xlane.xlu0 %587
    %589 = vmax.xlane.f32.xlu0 %v565
    %v590 = vpop.xlane.xlu0 %589
    %591 = vmax.xlane.f32.xlu0 %v566
    %v592 = vpop.xlane.xlu0 %591
    %v593 = vsub.f32 %v563, %v586
    %v594 = vsub.f32 %v564, %v588
    %v595 = vsub.f32 %v565, %v590
    %v596 = vsub.f32 %v566, %v592
    %v597 = vmul.f32 %v593, 1.442695
    %v598 = vpow.pop %v597
    %v599 = vmul.f32 %v594, 1.442695
    %v600 = vpow.pop %v599
    %v601 = vmul.f32 %v595, 1.442695
    %v602 = vpow.pop %v601
    %v603 = vmul.f32 %v596, 1.442695
    %v604 = vpow.pop %v603
    %605 = vadd.xlane.f32.xlu0 %v598
    %v606 = vpop.xlane.xlu0 %605
    %607 = vadd.xlane.f32.xlu0 %v600
    %v608 = vpop.xlane.xlu0 %607
    %609 = vadd.xlane.f32.xlu0 %v602
    %v610 = vpop.xlane.xlu0 %609
    %611 = vadd.xlane.f32.xlu0 %v604
    %v612 = vpop.xlane.xlu0 %611
    %v613 = vlog2.pop %v606
    %v614 = vmul.f32 %v613, 0.6931472
    %v615 = vlog2.pop %v608
    %v616 = vmul.f32 %v615, 0.6931472
    %v617 = vlog2.pop %v610
    %v618 = vmul.f32 %v617, 0.6931472
    %v619 = vlog2.pop %v612
    %v620 = vmul.f32 %v619, 0.6931472
    %v621 = vadd.f32 %v586, %v614
    %v622 = vadd.f32 %v588, %v616
    %v623 = vadd.f32 %v590, %v618
    %v624 = vadd.f32 %v592, %v620
    %625 = vset.pattern.permute.xlu0 0
    %626 = vperm.xlu0 %625, %v567
    %v627 = vpop.permute.xlu0 %626
    %628 = vset.pattern.permute.xlu0 0
    %629 = vperm.xlu0 %628, %v568
    %v630 = vpop.permute.xlu0 %629
    %631 = vset.pattern.permute.xlu0 0
    %632 = vperm.xlu0 %631, %v569
    %v633 = vpop.permute.xlu0 %632
    %634 = vset.pattern.permute.xlu0 0
    %635 = vperm.xlu0 %634, %v570
    %v636 = vpop.permute.xlu0 %635
    %vm637 = vcmp.eq.s32.totalorder %v584, %v627
    %vm638 = vcmp.eq.s32.totalorder %v584, %v630
    %vm639 = vcmp.eq.s32.totalorder %v584, %v633
    %vm640 = vcmp.eq.s32.totalorder %v584, %v636
    %v641 = vsel %vm637, %v563, 0.0
    %v642 = vsel %vm638, %v564, 0.0
    %v643 = vsel %vm639, %v565, 0.0
    %v644 = vsel %vm640, %v566, 0.0
    %645 = vadd.xlane.f32.xlu0 %v641
    %v646 = vpop.xlane.xlu0 %645
    %647 = vadd.xlane.f32.xlu0 %v642
    %v648 = vpop.xlane.xlu0 %647
    %649 = vadd.xlane.f32.xlu0 %v643
    %v650 = vpop.xlane.xlu0 %649
    %651 = vadd.xlane.f32.xlu0 %v644
    %v652 = vpop.xlane.xlu0 %651
    %vm653 = vcmask 7168
    %v654 = vsel %vm653, %v579, 0.0
    %v655 = vsel %vm653, %v580, 0.0
    %v656 = vadd.f32 %v654, %v655
    %v657 = vsel %vm653, %v581, 0.0
    %v658 = vadd.f32 %v656, %v657
    %v659 = vsel %vm653, %v582, 0.0
    %v660 = vadd.f32 %v658, %v659
    %661 = vadd.xlane.f32.xlu0 %v660
    %v662 = vpop.xlane.xlu0 %661
    %v663 = vrot.slane %v662, 4
    %v664 = vadd.f32 %v662, %v663
    %v665 = vrot.slane %v664, 2
    %v666 = vadd.f32 %v664, %v665
    %v667 = vrot.slane %v666, 1
    %v668 = vadd.f32 %v666, %v667
    %s669 = vtos %v668
    %v670 = vsub.f32 %v621, %v646
    %v671 = vsub.f32 %v622, %v648
    %v672 = vsub.f32 %v623, %v650
    %v673 = vsub.f32 %v624, %v652
    %v674 = vmul.f32 %v670, %v579
    %v675 = vmul.f32 %v671, %v580
    %v676 = vmul.f32 %v672, %v581
    %v677 = vmul.f32 %v673, %v582
    %v678 = vsel %vm653, %v674, 0.0
    %v679 = vsel %vm653, %v675, 0.0
    %v680 = vadd.f32 %v678, %v679
    %v681 = vsel %vm653, %v676, 0.0
    %v682 = vadd.f32 %v680, %v681
    %v683 = vsel %vm653, %v677, 0.0
    %v684 = vadd.f32 %v682, %v683
    %685 = vadd.xlane.f32.xlu0 %v684
    %v686 = vpop.xlane.xlu0 %685
    %v687 = vrot.slane %v686, 4
    %v688 = vadd.f32 %v686, %v687
    %v689 = vrot.slane %v688, 2
    %v690 = vadd.f32 %v688, %v689
    %v691 = vrot.slane %v690, 1
    %v692 = vadd.f32 %v690, %v691
    %s693 = vtos %v692
    %s694 = smax.f32 %s669, 1.0
    %v695 = vstv %s694
    %v696 = vrcp.pop %v695
    %s697 = vtos %v696
    %s698 = smul.f32 %s693, %s697
    %699 = vrot.lane.b32.xlu0 %v60, 112
    %v700 = vpop.permute.xlu0 %699
    %v701 = vsel %vm226, %v700, 0
    %703 = vmatprep.subr.mxu0 0.0
    %704 = vmatpush1.msra.mxu0 %v145
    %705 = vmatprep.subr.mxu0 0.0
    %706 = vmatpush1.msra.mxu0 0.0
    %707 = vmatprep.subr.mxu0 0.0
    %708 = vmatpush1.msra.mxu0 0.0
    %709 = vmatprep.subr.mxu0 0.0
    %710 = vmatpush1.msra.mxu0 0.0
    %711 = vmatprep.subr.mxu0 0.0
    %712 = vmatpush1.msra.mxu0 0.0
    %713 = vmatprep.subr.mxu0 0.0
    %714 = vmatpush1.msra.mxu0 0.0
    %715 = vmatprep.subr.mxu0 0.0
    %716 = vmatpush1.msra.mxu0 0.0
    %717 = vmatprep.subr.mxu0 0.0
    %718 = vmatpush1.msra.mxu0 0.0
    %719 = vmatprep.subr.mxu0 0.0
    %720 = vmatpush1.msra.mxu0 0.0
    %721 = vmatprep.subr.mxu0 0.0
    %722 = vmatpush1.msra.mxu0 0.0
    %723 = vmatprep.subr.mxu0 0.0
    %724 = vmatpush1.msra.mxu0 0.0
    %725 = vmatprep.subr.mxu0 0.0
    %726 = vmatpush1.msra.mxu0 0.0
    %727 = vmatprep.subr.mxu0 0.0
    %728 = vmatpush1.msra.mxu0 0.0
    %729 = vmatprep.subr.mxu0 0.0
    %730 = vmatpush1.msra.mxu0 0.0
    %731 = vmatprep.subr.mxu0 0.0
    %732 = vmatpush1.msra.mxu0 0.0
    %733 = vmatprep.subr.mxu0 0.0
    %734 = vmatpush1.msra.mxu0 0.0
    %735 = vmatprep.subr.mxu0 0.0
    %736 = vmatpush1.msra.mxu0 0.0
    %737 = vmatprep.subr.mxu0 0.0
    %738 = vmatpush1.msra.mxu0 0.0
    %739 = vmatprep.subr.mxu0 0.0
    %740 = vmatpush1.msra.mxu0 0.0
    %741 = vmatprep.subr.mxu0 0.0
    %742 = vmatpush1.msra.mxu0 0.0
    %743 = vmatprep.subr.mxu0 0.0
    %744 = vmatpush1.msra.mxu0 0.0
    %745 = vmatprep.subr.mxu0 0.0
    %746 = vmatpush1.msra.mxu0 0.0
    %747 = vmatprep.subr.mxu0 0.0
    %748 = vmatpush1.msra.mxu0 0.0
    %749 = vmatprep.subr.mxu0 0.0
    %750 = vmatpush1.msra.mxu0 0.0
    %751 = vmatprep.subr.mxu0 0.0
    %752 = vmatpush1.msra.mxu0 0.0
    %753 = vmatprep.subr.mxu0 0.0
    %754 = vmatpush1.msra.mxu0 0.0
    %755 = vmatprep.subr.mxu0 0.0
    %756 = vmatpush1.msra.mxu0 0.0
    %757 = vmatprep.subr.mxu0 0.0
    %758 = vmatpush1.msra.mxu0 0.0
    %759 = vmatprep.subr.mxu0 0.0
    %760 = vmatpush1.msra.mxu0 0.0
    %761 = vmatprep.subr.mxu0 0.0
    %762 = vmatpush1.msra.mxu0 0.0
    %763 = vmatprep.subr.mxu0 0.0
    %764 = vmatpush1.msra.mxu0 0.0
    %765 = vmatprep.subr.mxu0 0.0
    %766 = vmatpush1.msra.mxu0 0.0
    %767 = vmatprep.mubr.f32.mxu0 0.0
    %768 = vmatmul.mubr.f32.gmra.mrb[0].mxu0 %v701
    %v769 = vpop.f32.mrb[0].mxu0
    %v770 = vadd.f32 0.0, %v769
    %v771 = vpop.f32.mrb[0].mxu0
    %772 = vdwg.mxu0
    %v773 = vlaneseq
    %v774 = vshrl.u32 %v773, 7
    %v775 = vsub.s32 4, %v774
    %v776 = vrot.slane %v59, %v775
    %777 = vrot.lane.b32.xlu0 %v60, 104
    %v778 = vpop.permute.xlu0 %777
    %v779 = vsel %vm356, %v778, 0
    %781 = vmatprep.subr.mxu0 0.0
    %782 = vmatpush1.msra.mxu0 %v539
    %783 = vmatprep.subr.mxu0 0.0
    %784 = vmatpush1.msra.mxu0 %v545
    %785 = vmatprep.subr.mxu0 0.0
    %786 = vmatpush1.msra.mxu0 %v551
    %787 = vmatprep.subr.mxu0 0.0
    %788 = vmatpush1.msra.mxu0 %v557
    %789 = vmatprep.subr.mxu0 0.0
    %790 = vmatpush1.msra.mxu0 0.0
    %791 = vmatprep.subr.mxu0 0.0
    %792 = vmatpush1.msra.mxu0 0.0
    %793 = vmatprep.subr.mxu0 0.0
    %794 = vmatpush1.msra.mxu0 0.0
    %795 = vmatprep.subr.mxu0 0.0
    %796 = vmatpush1.msra.mxu0 0.0
    %797 = vmatprep.subr.mxu0 0.0
    %798 = vmatpush1.msra.mxu0 0.0
    %799 = vmatprep.subr.mxu0 0.0
    %800 = vmatpush1.msra.mxu0 0.0
    %801 = vmatprep.subr.mxu0 0.0
    %802 = vmatpush1.msra.mxu0 0.0
    %803 = vmatprep.subr.mxu0 0.0
    %804 = vmatpush1.msra.mxu0 0.0
    %805 = vmatprep.subr.mxu0 0.0
    %806 = vmatpush1.msra.mxu0 0.0
    %807 = vmatprep.subr.mxu0 0.0
    %808 = vmatpush1.msra.mxu0 0.0
    %809 = vmatprep.subr.mxu0 0.0
    %810 = vmatpush1.msra.mxu0 0.0
    %811 = vmatprep.subr.mxu0 0.0
    %812 = vmatpush1.msra.mxu0 0.0
    %813 = vmatprep.subr.mxu0 0.0
    %814 = vmatpush1.msra.mxu0 0.0
    %815 = vmatprep.subr.mxu0 0.0
    %816 = vmatpush1.msra.mxu0 0.0
    %817 = vmatprep.subr.mxu0 0.0
    %818 = vmatpush1.msra.mxu0 0.0
    %819 = vmatprep.subr.mxu0 0.0
    %820 = vmatpush1.msra.mxu0 0.0
    %821 = vmatprep.subr.mxu0 0.0
    %822 = vmatpush1.msra.mxu0 0.0
    %823 = vmatprep.subr.mxu0 0.0
    %824 = vmatpush1.msra.mxu0 0.0
    %825 = vmatprep.subr.mxu0 0.0
    %826 = vmatpush1.msra.mxu0 0.0
    %827 = vmatprep.subr.mxu0 0.0
    %828 = vmatpush1.msra.mxu0 0.0
    %829 = vmatprep.subr.mxu0 0.0
    %830 = vmatpush1.msra.mxu0 0.0
    %831 = vmatprep.subr.mxu0 0.0
    %832 = vmatpush1.msra.mxu0 0.0
    %833 = vmatprep.subr.mxu0 0.0
    %834 = vmatpush1.msra.mxu0 0.0
    %835 = vmatprep.subr.mxu0 0.0
    %836 = vmatpush1.msra.mxu0 0.0
    %837 = vmatprep.subr.mxu0 0.0
    %838 = vmatpush1.msra.mxu0 0.0
    %839 = vmatprep.subr.mxu0 0.0
    %840 = vmatpush1.msra.mxu0 0.0
    %841 = vmatprep.subr.mxu0 0.0
    %842 = vmatpush1.msra.mxu0 0.0
    %843 = vmatprep.subr.mxu0 0.0
    %844 = vmatpush1.msra.mxu0 0.0
    %845 = vmatprep.mubr.f32.mxu0 0.0
    %846 = vmatmul.mubr.f32.gmra.mrb[0].mxu0 %v779
    %v847 = vpop.f32.mrb[0].mxu0
    %v848 = vadd.f32 %v776, %v847
    %v849 = vpop.f32.mrb[0].mxu0
    %850 = vdwg.mxu0
    %v851 = vmul.f32 %v848, %v848
    %vm852 = vcmask 125952
    %v853 = vsel %vm852, %v851, 0.0
    %854 = vadd.xlane.f32.xlu0 %v853
    %v855 = vpop.xlane.xlu0 %854
    %v856 = vadd.f32 %v855, 1e-12
    %v857 = vrsqrt.pop %v856
    %v858 = vmul.f32 %v848, %v857
    %v859 = vmul.f32 %v770, %v770
    %v860 = vsel %vm852, %v859, 0.0
    %861 = vadd.xlane.f32.xlu0 %v860
    %v862 = vpop.xlane.xlu0 %861
    %v863 = vadd.f32 %v862, 1e-12
    %v864 = vrsqrt.pop %v863
    %v865 = vmul.f32 %v770, %v864
    %v866 = vmul.f32 %v858, %v865
    %v867 = vsel %vm852, %v866, 0.0
    %868 = vadd.xlane.f32.xlu0 %v867
    %v869 = vpop.xlane.xlu0 %868
    %v870 = vsub.f32 1.0, %v869
    %vm871 = vcmask 3072
    %v872 = vsel %vm871, %v870, 0.0
    %873 = vadd.xlane.f32.xlu0 %v872
    %v874 = vpop.xlane.xlu0 %873
    %v875 = vrot.slane %v874, 4
    %v876 = vadd.f32 %v874, %v875
    %v877 = vrot.slane %v876, 2
    %v878 = vadd.f32 %v876, %v877
    %v879 = vrot.slane %v878, 1
    %v880 = vadd.f32 %v878, %v879
    %s881 = vtos %v880
    %s882 = smul.f32 %s881, 0.25
    %s883 = sadd.f32 %s698, %s882
    %s884 = scalar_lea.smem [#allocation2], 0
    %885 = sst [smem:[%s884]] %s883
    %s886 = scalar_lea.smem [#allocation2], 1
    %887 = sst [smem:[%s886]] %s698
    %s888 = scalar_lea.smem [#allocation2], 2
    %889 = sst [smem:[%s888]] %s882
    // Predicated region
    $region22: #{_seed_forward_device.1} parent=1 // pred_check
      _
    $region23: #{_seed_forward_device.1} parent=1 // pred_check_branch
      %891 = sbr.rel (0) target = $region25
    $region24: #{_seed_forward_device.1} parent=1 // pred_region
      %s893 = ssub.s32 16, 16
      %894 = vsyncadd [#allocation3], %s893
      %s896 = sshll.u32 %s5, 4
      %s897 = int_to_ptr.vmem [resolvable:$true] %s896
      %899 = dma.smem_to_vmem [#allocation2], 16, %s897, [#allocation3]
    $region25: #{_seed_forward_device.1} parent=1 // pred_fallthru
      _
    // Predicated region
    $region26: #{_seed_forward_device.1} parent=1 // pred_check
      _
    $region27: #{_seed_forward_device.1} parent=1 // pred_check_branch
      %901 = sbr.rel (0) target = $region29
    $region28: #{_seed_forward_device.1} parent=1 // pred_region
      %902 = dma.done [#allocation3], 16
    $region29: #{_seed_forward_device.1} parent=1 // pred_fallthru
      _
    %903 = sfence
    %904 = vsyncpa [#allocation3], 1

</llo_original>
